<compile_context>
chip_gen: v6e
topology: v6e:2x2x1
jax: 0.10.0
libtpu: 0.0.40
codegen_flags: <defaults>
</compile_context>

<pallas_src>
import functools

import jax
import jax.numpy as jnp
from jax import lax
from jax.experimental import pallas as pl
from jax.experimental.pallas import tpu as pltpu


def _round_up(x, m):
    return (x + m - 1) // m * m


# ----------------------------------------------------------------------------
# Pallas kernels
# ----------------------------------------------------------------------------
def _conv_matmul_kernel(p_ref, w_ref, nb_ref, out_ref, acc_ref):
    """Tiled im2col matmul: out = patches @ w + (noise + bias).

    Grid = (M_tiles, K_tiles); K is the reduction axis (last).  acc_ref is a
    VMEM f32 accumulator that lives across the K axis.
    """
    k = pl.program_id(1)

    @pl.when(k == 0)
    def _():
        acc_ref[...] = jnp.zeros_like(acc_ref)

    acc_ref[...] += jnp.dot(
        p_ref[...], w_ref[...], preferred_element_type=jnp.float32
    )

    @pl.when(k == pl.num_programs(1) - 1)
    def _():
        # noise already has the bias folded in (one fewer HBM operand).
        out_ref[...] = (acc_ref[...] + nb_ref[...]).astype(out_ref.dtype)


def _abs_sum_kernel(x_ref, mask_ref):
    """in_mask[c] = sum_{N,H,W} |x|, accumulated across the whole grid.

    x_ref block: (1, C, t_hw)  -- H*W on lanes (dense), C on sublanes.
    mask_ref:    (1, C)        -- resident accumulator (same block every step).
    """
    @pl.when(jnp.logical_and(pl.program_id(0) == 0, pl.program_id(1) == 0))
    def _():
        mask_ref[...] = jnp.zeros_like(mask_ref)

    mask_ref[...] += jnp.sum(jnp.abs(x_ref[...]), axis=(0, 2))[None, :]


# ----------------------------------------------------------------------------
# JAX glue: im2col from NHWC (no post-transpose of the patch tensor)
# ----------------------------------------------------------------------------
def _im2col_nhwc(x_nhwc, kh, kw, stride, padding):
    """Returns patches [N*OH*OW, KH*KW*C] plus (oh, ow)."""
    n, h, w, c = x_nhwc.shape
    x_pad = jnp.pad(
        x_nhwc, ((0, 0), (padding, padding), (padding, padding), (0, 0))
    )
    oh = (h + 2 * padding - kh) // stride + 1
    ow = (w + 2 * padding - kw) // stride + 1
    cols = []
    for i in range(kh):
        for j in range(kw):
            cols.append(
                x_pad[:, i : i + stride * oh : stride,
                          j : j + stride * ow : stride, :]
            )  # [N, OH, OW, C]
    patches = jnp.stack(cols, axis=3)                # [N, OH, OW, KH*KW, C]
    return patches.reshape(n * oh * ow, kh * kw * c), oh, ow


# ----------------------------------------------------------------------------
# Wrapper
# ----------------------------------------------------------------------------
@functools.partial(jax.jit, static_argnames=("stride", "padding"))
def conv2d_observer_forward(x, weight, bias, noise, *, stride=1, padding=1):
    """Forward of Conv2dObserver.

    Args:
      x:      [N, C, H, W]    float32 (NCHW, PyTorch convention)
      weight: [OC, C, KH, KW] float32
      bias:   [OC]            float32
      noise:  [N, OC, OH, OW] float32 (pre-drawn gaussian noise)
    Returns:
      (output [N, OC, OH, OW], in_mask [C])
    """
    n, c, h, w = x.shape
    oc, _, kh, kw = weight.shape

    # ---- im2col (NHWC, no extra transpose of the patch tensor) -------------
    x_nhwc = jnp.transpose(x, (0, 2, 3, 1))
    patches, oh, ow = _im2col_nhwc(x_nhwc, kh, kw, stride, padding)  # [M, K]
    m, k = patches.shape

    # ---- lane-align K and OC (zero-pad weight; slice output back) ----------
    tm = 256                                    # sweep 256-512 for big convs
    oc_pad = _round_up(oc, 128)                 # lane-dense output stores
    if k <= 512:
        k_pad, tk = _round_up(k, 128), _round_up(k, 128)
    else:
        k_pad, tk = _round_up(k, 512), 512
    m_pad = _round_up(m, tm)

    patches_p = jnp.pad(patches, ((0, m_pad - m), (0, k_pad - k)))
    # weight [OC,C,KH,KW] -> [KH,KW,C,OC] -> [K,OC], matching patch K order.
    w_mat = jnp.transpose(weight, (2, 3, 1, 0)).reshape(k, oc)
    w_mat = jnp.pad(w_mat, ((0, k_pad - k), (0, oc_pad - oc)))
    # Fold bias into the pre-drawn noise once (saves one operand / HBM pass).
    nb = jnp.transpose(noise, (0, 2, 3, 1)).reshape(m, oc) + bias[None, :]
    nb = jnp.pad(nb, ((0, m_pad - m), (0, oc_pad - oc)))

    mt, kt = m_pad // tm, k_pad // tk

    cost_mm = pl.CostEstimate(
        flops=2 * m_pad * k_pad * oc_pad,
        transcendentals=0,
        bytes_accessed=4 * (m_pad * k_pad + k_pad * oc_pad + 2 * m_pad * oc_pad),
    )

    out_mat = pl.pallas_call(
        _conv_matmul_kernel,
        out_shape=jax.ShapeDtypeStruct((m_pad, oc_pad), jnp.float32),
        grid_spec=pltpu.PrefetchScalarGridSpec(
            num_scalar_prefetch=0,
            grid=(mt, kt),
            in_specs=[
                pl.BlockSpec((tm, tk), lambda i, kk: (i, kk)),       # patches
                pl.BlockSpec((tk, oc_pad), lambda i, kk: (kk, 0)),   # weight
                pl.BlockSpec((tm, oc_pad), lambda i, kk: (i, 0)),    # noise+bias
            ],
            out_specs=pl.BlockSpec((tm, oc_pad), lambda i, kk: (i, 0)),
            scratch_shapes=[pltpu.VMEM((tm, oc_pad), jnp.float32)],
        ),
        compiler_params=pltpu.CompilerParams(
            dimension_semantics=("parallel", "arbitrary"),
            vmem_limit_bytes=48 * 1024 * 1024,   # safe on v7x's 64 MiB/TC
        ),
        cost_estimate=cost_mm,
    )(patches_p, w_mat, nb)

    output = jnp.transpose(
        out_mat[:m, :oc].reshape(n, oh, ow, oc), (0, 3, 1, 2)
    )

    # ---- forward-hook statistic: in_mask += sum_{N,H,W} |x| ----------------
    # Read x directly in NCHW as [N, C, H*W]; H*W sits on lanes (dense) and is
    # tiled with an accumulating (resident) output block.
    hw = h * w
    t_hw = min(2048, _round_up(hw, 128))
    hw_pad = _round_up(hw, t_hw)
    x3 = jnp.pad(x.reshape(n, c, hw), ((0, 0), (0, 0), (0, hw_pad - hw)))

    cost_abs = pl.CostEstimate(
        flops=2 * n * c * hw_pad,
        transcendentals=0,
        bytes_accessed=4 * (n * c * hw_pad + c),
    )

    in_mask = pl.pallas_call(
        _abs_sum_kernel,
        out_shape=jax.ShapeDtypeStruct((1, c), jnp.float32),
        grid_spec=pltpu.PrefetchScalarGridSpec(
            num_scalar_prefetch=0,
            grid=(n, hw_pad // t_hw),
            in_specs=[pl.BlockSpec((1, c, t_hw), lambda b, j: (b, 0, j))],
            out_specs=pl.BlockSpec((1, c), lambda b, j: (0, 0)),
        ),
        compiler_params=pltpu.CompilerParams(
            dimension_semantics=("arbitrary", "arbitrary"),
            vmem_limit_bytes=48 * 1024 * 1024,
        ),
        cost_estimate=cost_abs,
    )(x3).reshape(c)

    # TODO(synk): the backward hook (_backward_hook: out_mask grad statistic +
    # gradient replacement with ones) has no forward-pass Pallas equivalent;
    # only forward semantics are implemented here.
    return output, in_mask


# ----------------------------------------------------------------------------
# Demo / self-check
# ----------------------------------------------------------------------------
if __name__ == "__main__":
    key = jax.random.PRNGKey(0)
    k_x, k_w, k_b, k_n = jax.random.split(key, 4)

    # Small shapes consistent with a Conv2d(4 -> 8, kernel_size=3, padding=1).
    N, C, H, W = 2, 4, 16, 16
    OC, KH, KW = 8, 3, 3
    stride, padding = 1, 1
    OH, OW = H, W

    x = jax.random.normal(k_x, (N, C, H, W), jnp.float32)
    weight = jax.random.normal(k_w, (OC, C, KH, KW), jnp.float32) * 0.1
    bias = jax.random.normal(k_b, (OC,), jnp.float32) * 0.1
    noise = jax.random.normal(k_n, (N, OC, OH, OW), jnp.float32)

    out, in_mask = conv2d_observer_forward(
        x, weight, bias, noise, stride=stride, padding=padding
    )
    out = jax.block_until_ready(out)
    in_mask = jax.block_until_ready(in_mask)

    # Reference check against XLA conv + noise and direct reduction.
    ref_conv = lax.conv_general_dilated(
        x, weight, window_strides=(stride, stride),
        padding=((padding, padding), (padding, padding)),
        dimension_numbers=("NCHW", "OIHW", "NCHW"),
    ) + bias.reshape(1, OC, 1, 1)
    ref_out = ref_conv + noise
    ref_mask = jnp.sum(jnp.abs(x), axis=(0, 2, 3))

    assert out.shape == (N, OC, OH, OW)
    assert in_mask.shape == (C,)
    assert jnp.allclose(out, ref_out, atol=1e-4, rtol=1e-4)
    assert jnp.allclose(in_mask, ref_mask, atol=1e-4, rtol=1e-4)

    print("KERNEL_OK")
</pallas_src>

<mosaic_0001>
module attributes {stable_mosaic.version = 11 : i64} {
  func.func @_conv_matmul_kernel(%arg0: i32, %arg1: i32, %arg2: memref<256x128xf32, #tpu.memory_space<vmem>>, %arg3: memref<128x128xf32, #tpu.memory_space<vmem>>, %arg4: memref<256x128xf32, #tpu.memory_space<vmem>>, %arg5: memref<256x128xf32, #tpu.memory_space<vmem>>, %arg6: memref<256x128xf32, #tpu.memory_space<vmem>>) attributes {dimension_semantics = [#tpu.dimension_semantics<parallel>, #tpu.dimension_semantics<arbitrary>], iteration_bounds = array<i64: 2, 1>, scalar_prefetch = 0 : i64, scratch_operands = 1 : i64, tpu.core_type = #tpu.core_type<tc>, window_params = [{transform_indices = @transform_0, window_bounds = array<i64: 256, 128>}, {transform_indices = @transform_1, window_bounds = array<i64: 128, 128>}, {transform_indices = @transform_2, window_bounds = array<i64: 256, 128>}, {transform_indices = @transform_3, window_bounds = array<i64: 256, 128>}]} {
    %c0_i32 = arith.constant 0 : i32
    %0 = arith.cmpi eq, %arg1, %c0_i32 : i32
    %1 = arith.extui %0 : i1 to i32
    %c0_i32_0 = arith.constant 0 : i32
    %2 = arith.cmpi ne, %1, %c0_i32_0 : i32
    scf.if %2 {
      %cst_10 = arith.constant 0.000000e+00 : f32
      %12 = vector.broadcast %cst_10 : f32 to vector<256x128xf32>
      %c0_11 = arith.constant 0 : index
      %c0_12 = arith.constant 0 : index
      %13 = vector.load %arg6[%c0_11, %c0_12] : memref<256x128xf32, #tpu.memory_space<vmem>>, vector<256x128xf32>
      tpu.vector_store %arg6[%c0_11, %c0_12], %12 {strides = array<i32>} : memref<256x128xf32, #tpu.memory_space<vmem>>, vector<256x128xf32>,
    } else {
    }
    %c0 = arith.constant 0 : index
    %c0_1 = arith.constant 0 : index
    %3 = vector.load %arg6[%c0, %c0_1] : memref<256x128xf32, #tpu.memory_space<vmem>>, vector<256x128xf32>
    %c0_2 = arith.constant 0 : index
    %c0_3 = arith.constant 0 : index
    %4 = vector.load %arg2[%c0_2, %c0_3] : memref<256x128xf32, #tpu.memory_space<vmem>>, vector<256x128xf32>
    %c0_4 = arith.constant 0 : index
    %c0_5 = arith.constant 0 : index
    %5 = vector.load %arg3[%c0_4, %c0_5] : memref<128x128xf32, #tpu.memory_space<vmem>>, vector<128x128xf32>
    %cst = arith.constant dense<0.000000e+00> : vector<256x128xf32>
    %6 = tpu.matmul %4, %5, %cst {dimension_numbers = #tpu.dot_dimension_numbers<[1], [0], [0], [1], [0, 0, 1, 1], [], []>} : vector<256x128xf32>, vector<128x128xf32>, vector<256x128xf32> -> vector<256x128xf32>
    %7 = arith.addf %3, %6 : vector<256x128xf32>
    %c0_6 = arith.constant 0 : index
    %c0_7 = arith.constant 0 : index
    %8 = vector.load %arg6[%c0_6, %c0_7] : memref<256x128xf32, #tpu.memory_space<vmem>>, vector<256x128xf32>
    tpu.vector_store %arg6[%c0_6, %c0_7], %7 {strides = array<i32>} : memref<256x128xf32, #tpu.memory_space<vmem>>, vector<256x128xf32>,
    %c0_i32_8 = arith.constant 0 : i32
    %9 = arith.cmpi eq, %arg1, %c0_i32_8 : i32
    %10 = arith.extui %9 : i1 to i32
    %c0_i32_9 = arith.constant 0 : i32
    %11 = arith.cmpi ne, %10, %c0_i32_9 : i32
    scf.if %11 {
      %c0_10 = arith.constant 0 : index
      %c0_11 = arith.constant 0 : index
      %12 = vector.load %arg6[%c0_10, %c0_11] : memref<256x128xf32, #tpu.memory_space<vmem>>, vector<256x128xf32>
      %c0_12 = arith.constant 0 : index
      %c0_13 = arith.constant 0 : index
      %13 = vector.load %arg4[%c0_12, %c0_13] : memref<256x128xf32, #tpu.memory_space<vmem>>, vector<256x128xf32>
      %14 = arith.addf %12, %13 : vector<256x128xf32>
      %c0_14 = arith.constant 0 : index
      %c0_15 = arith.constant 0 : index
      %15 = vector.load %arg5[%c0_14, %c0_15] : memref<256x128xf32, #tpu.memory_space<vmem>>, vector<256x128xf32>
      tpu.vector_store %arg5[%c0_14, %c0_15], %14 {strides = array<i32>} : memref<256x128xf32, #tpu.memory_space<vmem>>, vector<256x128xf32>,
    } else {
    }
    return
  }
  func.func @transform_0(%arg0: i32, %arg1: i32) -> (i32, i32) {
    %c0_i32 = arith.constant 0 : i32
    return %arg0, %arg1 : i32, i32
  }
  func.func @transform_1(%arg0: i32, %arg1: i32) -> (i32, i32) {
    %c0_i32 = arith.constant 0 : i32
    %c0_i32_0 = arith.constant 0 : i32
    return %arg1, %c0_i32 : i32, i32
  }
  func.func @transform_2(%arg0: i32, %arg1: i32) -> (i32, i32) {
    %c0_i32 = arith.constant 0 : i32
    %c0_i32_0 = arith.constant 0 : i32
    return %arg0, %c0_i32 : i32, i32
  }
  func.func @transform_3(%arg0: i32, %arg1: i32) -> (i32, i32) {
    %c0_i32 = arith.constant 0 : i32
    %c0_i32_0 = arith.constant 0 : i32
    return %arg0, %c0_i32 : i32, i32
  }
}

module attributes {stable_mosaic.version = 11 : i64} {
  func.func @_abs_sum_kernel(%arg0: i32, %arg1: i32, %arg2: memref<1x4x256xf32, #tpu.memory_space<vmem>>, %arg3: memref<1x4xf32, #tpu.memory_space<vmem>>) attributes {dimension_semantics = [#tpu.dimension_semantics<arbitrary>, #tpu.dimension_semantics<arbitrary>], iteration_bounds = array<i64: 2, 1>, scalar_prefetch = 0 : i64, scratch_operands = 0 : i64, tpu.core_type = #tpu.core_type<tc>, window_params = [{transform_indices = @transform_0, window_bounds = array<i64: 1, 4, 256>}, {pipeline_mode = #tpu.pipeline_mode<synchronous>, transform_indices = @transform_1, window_bounds = array<i64: 1, 4>}]} {
    %c0_i32 = arith.constant 0 : i32
    %0 = arith.cmpi eq, %arg0, %c0_i32 : i32
    %c0_i32_0 = arith.constant 0 : i32
    %1 = arith.cmpi eq, %arg1, %c0_i32_0 : i32
    %2 = arith.andi %0, %1 : i1
    %3 = arith.extui %2 : i1 to i32
    %c0_i32_1 = arith.constant 0 : i32
    %4 = arith.cmpi ne, %3, %c0_i32_1 : i32
    scf.if %4 {
      %cst_8 = arith.constant 0.000000e+00 : f32
      %12 = vector.broadcast %cst_8 : f32 to vector<1x4xf32>
      %c0_9 = arith.constant 0 : index
      %c0_10 = arith.constant 0 : index
      %13 = vector.load %arg3[%c0_9, %c0_10] : memref<1x4xf32, #tpu.memory_space<vmem>>, vector<1x4xf32>
      tpu.vector_store %arg3[%c0_9, %c0_10], %12 {strides = array<i32>} : memref<1x4xf32, #tpu.memory_space<vmem>>, vector<1x4xf32>,
    } else {
    }
    %c0 = arith.constant 0 : index
    %c0_2 = arith.constant 0 : index
    %5 = vector.load %arg3[%c0, %c0_2] : memref<1x4xf32, #tpu.memory_space<vmem>>, vector<1x4xf32>
    %c0_3 = arith.constant 0 : index
    %c0_4 = arith.constant 0 : index
    %c0_5 = arith.constant 0 : index
    %6 = vector.load %arg2[%c0_3, %c0_4, %c0_5] : memref<1x4x256xf32, #tpu.memory_space<vmem>>, vector<1x4x256xf32>
    %7 = math.absf %6 : vector<1x4x256xf32>
    %cst = arith.constant dense<0.000000e+00> : vector<4xf32>
    %8 = vector.multi_reduction <add>, %7, %cst [0, 2] : vector<1x4x256xf32> to vector<4xf32>
    %9 = vector.shape_cast %8 : vector<4xf32> to vector<1x4xf32>
    %10 = arith.addf %5, %9 : vector<1x4xf32>
    %c0_6 = arith.constant 0 : index
    %c0_7 = arith.constant 0 : index
    %11 = vector.load %arg3[%c0_6, %c0_7] : memref<1x4xf32, #tpu.memory_space<vmem>>, vector<1x4xf32>
    tpu.vector_store %arg3[%c0_6, %c0_7], %10 {strides = array<i32>} : memref<1x4xf32, #tpu.memory_space<vmem>>, vector<1x4xf32>,
    return
  }
  func.func @transform_0(%arg0: i32, %arg1: i32) -> (i32, i32, i32) {
    %c0_i32 = arith.constant 0 : i32
    %c0_i32_0 = arith.constant 0 : i32
    return %arg0, %c0_i32, %arg1 : i32, i32, i32
  }
  func.func @transform_1(%arg0: i32, %arg1: i32) -> (i32, i32) {
    %c0_i32 = arith.constant 0 : i32
    %c0_i32_0 = arith.constant 0 : i32
    %c0_i32_1 = arith.constant 0 : i32
    return %c0_i32, %c0_i32_0 : i32, i32
  }
}

</mosaic_0001>

<llo_original>
// kernel: conv2d_observer_forward.3
$region0: #{conv2d_observer_forward.3}
  #allocation0 [shape = 'u32[]', space=smem, size = 0x4, offset = 0x4, fixed_abs, tag = 'smem constant byte address 0x4 - core index']
  #allocation1 [shape = 'u32[144,128]{1,0:T(1,128)}', space=vmem, size = 0x12000, scoped, tag = 'internal scratch']
  %s0 = inlined_call_operand.vmem [shape: f32[2,4,256], index: 0, kind: input, shape index: {}]
  %s1 = inlined_call_operand.hbm [shape: f32[1,4], index: 1, kind: output, shape index: {}]
  %s2 = sld [smem:[#allocation0]]
  $region41: #{conv2d_observer_forward.3} parent=0
    _
  %s4 = ssub.s32 1, %s2
  %s5 = scalar_select 0, %s4, %s2
  $region1: #{conv2d_observer_forward.3} parent=0
    #allocation2 [shape = 'u8[512]{0}', space=vmem, size = 0x400, scoped, tag = 'output window, operand 0, single buffered']
    #allocation3 [shape = 's32[2]{0}', space=sflag, size = 0x8, scoped, tag = 'scoped memory for conv2d_observer_forward.3']
    %6 = vsyncpa [#allocation3], 0
    loop: start=0, step=1, limit=4
    $region2: #{conv2d_observer_forward.3} parent=1 // loop_pre_header
      _
    $region3: #{conv2d_observer_forward.3} parent=1 // loop_header
      %s8 = sphi 0, %s12
      %p9 = scmp.ge.s32.totalorder %s8, 4
      %s15 = sphi 0, %s27
      %s16 = sphi 0, %s23
      %s17 = sphi 0, %s15
      %s18 = sphi 0, %s16
      %s19 = sphi 0, %s17
      %s20 = sphi 0, %s18
      %s32 = sphi 0, %s34
      %s35 = sphi 0, %s32
      %s36 = sphi 0, %s35
      %s52 = sphi 0, %s36
      %s56 = sphi 0, %s56
      %s58 = sphi 0, %s56
      %s59 = sphi 0, %s58
      %s73 = sphi 0, %s59
    $region4: #{conv2d_observer_forward.3} parent=1 // loop_header_branch
      %11 = sbr.rel (%p9) target = $region8
    $region5: #{conv2d_observer_forward.3} parent=1 // loop_body
      %s13 = ssub.s32 %s8, 1
      %s14 = ssub.s32 %s8, 2
      %s21 = sadd.s32 1, %s16
      %p22 = scmp.ge.s32.totalorder %s21, 1
      %s23 = scalar_select %p22, 0, %s21
      %s24 = sadd.s32 1, %s15
      %s25 = scalar_select %p22, %s24, %s15
      %p26 = scmp.ge.s32.totalorder %s25, 2
      %s27 = scalar_select %p26, 0, %s25
      %s28 = ssub.s32 %s15, %s27
      %s29 = ssub.s32 %s16, %s23
      %s30 = sor.u32 %s28, %s29
      %p31 = scmp.eq.s32.totalorder %s30, 0
      %s33 = sadd.s32 %s32, 1
      %s34 = scalar_select %p31, %s32, %s33
      %p37 = pneg %p31
      %p38 = scmp.eq.s32.totalorder %s8, 1
      %p39 = por %p37, %p38
      %p40 = scmp.ne.s32.totalorder %s32, %s35
      %p41 = scmp.eq.s32.totalorder %s8, 0
      %p42 = por %p40, %p41
      %p43 = scmp.ne.s32.totalorder %s32, %s35
      %p44 = scmp.eq.s32.totalorder %s13, 1
      %p45 = por %p43, %p44
      %p46 = scmp.ne.s32.totalorder %s35, %s36
      %p47 = scmp.eq.s32.totalorder %s13, 0
      %p48 = por %p46, %p47
      %p49 = scmp.ne.s32.totalorder %s35, %s36
      %p50 = scmp.eq.s32.totalorder %s14, 1
      %p51 = por %p49, %p50
      %p53 = scmp.ne.s32.totalorder %s36, %s52
      %p54 = scmp.eq.s32.totalorder %s14, 0
      %p55 = por %p53, %p54
      %s57 = sadd.s32 %s56, 1
      %p60 = scmp.eq.s32.totalorder %s8, 1
      %p61 = scmp.ne.s32.totalorder %s56, %s58
      %p62 = scmp.eq.s32.totalorder %s8, 0
      %p63 = por %p61, %p62
      %p64 = scmp.ne.s32.totalorder %s56, %s58
      %p65 = scmp.eq.s32.totalorder %s13, 1
      %p66 = por %p64, %p65
      %p67 = scmp.ne.s32.totalorder %s58, %s59
      %p68 = scmp.eq.s32.totalorder %s13, 0
      %p69 = por %p67, %p68
      %p70 = scmp.ne.s32.totalorder %s58, %s59
      %p71 = scmp.eq.s32.totalorder %s14, 1
      %p72 = por %p70, %p71
      %p74 = scmp.ne.s32.totalorder %s59, %s73
      %p75 = scmp.eq.s32.totalorder %s14, 0
      %p76 = por %p74, %p75
      %p77 = scmp.le.s32.totalorder 1, %s8
      %p78 = scmp.lt.s32.totalorder %s8, 3
      %p79 = pnand %p77, %p78
      %p80 = pneg %p79
      // Predicated region
      $region9: #{conv2d_observer_forward.3} parent=5 // pred_check
        _
      $region10: #{conv2d_observer_forward.3} parent=5 // pred_check_branch
        %82 = sbr.rel (%p79) target = $region12
      $region11: #{conv2d_observer_forward.3} parent=5 // pred_region
        %s83 = ssub.s32 %s8, 1
      $region12: #{conv2d_observer_forward.3} parent=5 // pred_fallthru
        _
      %p84 = scmp.lt.s32.totalorder %s8, 2
      // Predicated region
      $region13: #{conv2d_observer_forward.3} parent=5 // pred_check
        %p85 = pneg %p84
      $region14: #{conv2d_observer_forward.3} parent=5 // pred_check_branch
        %87 = sbr.rel (%p85) target = $region16
      $region15: #{conv2d_observer_forward.3} parent=5 // pred_region
        // Predicated region
        $region17: #{conv2d_observer_forward.3} parent=15 // pred_check
          %p88 = pneg %p42
        $region18: #{conv2d_observer_forward.3} parent=15 // pred_check_branch
          %90 = sbr.rel (%p88) target = $region20
        $region19: #{conv2d_observer_forward.3} parent=15 // pred_region
          %s91 = smul.u32 2, %s16
          %p92 = scmp.lt.s32.totalorder %s15, 1
          %s93 = scalar_select %p92, %s15, 1
          %p94 = scmp.lt.s32.totalorder %s91, 1
          %s95 = scalar_select %p94, %s91, 1
          %s96 = smul.addr %s93, 2
          %s97 = sadd.s32 %s95, %s96
          %s98 = smul.addr %s97, 4
          %s99 = scalar_lea.vmem %s0, %s98
          %s100 = smul.u32 2, %s16
        $region20: #{conv2d_observer_forward.3} parent=15 // pred_fallthru
          _
      $region16: #{conv2d_observer_forward.3} parent=5 // pred_fallthru
        _
      %p101 = scmp.le.s32.totalorder 1, %s8
      %p102 = scmp.lt.s32.totalorder %s8, 3
      %p103 = pnand %p101, %p102
      %p104 = pneg %p103
      // Predicated region
      $region21: #{conv2d_observer_forward.3} parent=5 // pred_check
        _
      $region22: #{conv2d_observer_forward.3} parent=5 // pred_check_branch
        %106 = sbr.rel (%p103) target = $region24
      $region23: #{conv2d_observer_forward.3} parent=5 // pred_region
        %s107 = ssub.s32 %s8, 1
        %s108 = smul.u32 2, %s18
        %p109 = scmp.lt.s32.totalorder %s17, 1
        %s110 = scalar_select %p109, %s17, 1
        %p111 = scmp.lt.s32.totalorder %s108, 1
        %s112 = scalar_select %p111, %s108, 1
        %s113 = smul.addr %s110, 2
        %s114 = sadd.s32 %s112, %s113
        %s115 = smul.addr %s114, 4
        %s116 = scalar_lea.vmem %s0, %s115
        %p117 = pneg %p48
        %p118 = pneg %p45
        %p119 = pneg %p69
        %p120 = pneg %p66
        %s121 = smul.u32 2, %s18
        %p122 = scmp.lt.s32.totalorder %s17, 1
        %s123 = scalar_select %p122, %s17, 1
        %p124 = scmp.lt.s32.totalorder %s121, 1
        %s125 = scalar_select %p124, %s121, 1
        %s126 = smul.addr %s123, 2
        %s127 = sadd.s32 %s125, %s126
        %s128 = smul.addr %s127, 4
        %s129 = scalar_lea.vmem %s0, %s128
        %s130 = smul.u32 2, %s18
        %p131 = scmp.eq.s32.totalorder %s17, 0
        %p132 = scmp.eq.s32.totalorder %s18, 0
        %p133 = pnand %p131, %p132
        %p134 = pneg %p133
        // Predicated region
        $region25: #{conv2d_observer_forward.3} parent=23 // pred_check
          _
        $region26: #{conv2d_observer_forward.3} parent=23 // pred_check_branch
          %136 = sbr.rel (%p133) target = $region28
        $region27: #{conv2d_observer_forward.3} parent=23 // pred_region
          %vm137 = vcmask 24576
          %138 = vst.msk [vmem:[#allocation2] sm:$0x1] %vm137, 0.0
        $region28: #{conv2d_observer_forward.3} parent=23 // pred_fallthru
          _
        %v139 = vld [vmem:[#allocation2] sm:$0x1]
        %v140 = vld [vmem:[%s129] sm:$0xff]
        %v141 = vand.u32 2147483647, %v140
        %v143 = vcombine.high %v141, %v141
        %vm145 = vcmask 1043456
        %v146 = vsel %vm145, %v141, 0.0
        %v147 = vsel %vm145, %v143, 0.0
        %v148 = vadd.f32 %v146, %v147
        %149 = vadd.xlane.f32.xlu0 %v148
        %v150 = vpop.xlane.xlu0 %149
        %v152 = vlaneseq
        %v153 = vshrl.u32 %v152, 7
        %v154 = vsub.s32 0, %v153
        %v155 = vrot.slane %v150, %v154
        %v156 = vlaneseq
        %v157 = vshrl.u32 %v156, 7
        %v158 = vsub.s32 1, %v157
        %v159 = vrot.slane %v150, %v158
        %v160 = vlaneseq
        %v161 = vshrl.u32 %v160, 7
        %v162 = vsub.s32 2, %v161
        %v163 = vrot.slane %v150, %v162
        %v164 = vlaneseq
        %v165 = vshrl.u32 %v164, 7
        %v166 = vsub.s32 3, %v165
        %v167 = vrot.slane %v150, %v166
        %v168 = vcombine.low %v155, %v159
        %v169 = vcombine.low %v163, %v167
        %v171 = vunpack.c.l.s4 1966171168
        %v172 = vunpack.c.0.s8 %v171
        %v173 = vlaneseq
        %v174 = vshrl.u32 %v173, 7
        %v175 = vsub.s32 %v172, %v174
        %v176 = vrot.slane %v168, %v175
        %v178 = vunpack.c.l.s4 1966171168
        %v179 = vunpack.c.0.s8 %v178
        %v180 = vlaneseq
        %v181 = vshrl.u32 %v180, 7
        %v182 = vsub.s32 %v179, %v181
        %v183 = vrot.slane %v169, %v182
        %v184 = vcombine.low %v176, %v183
        %v186 = vunpack.c.l.s4 1966171168
        %v187 = vunpack.c.0.s8 %v186
        %v188 = vlaneseq
        %v189 = vshrl.u32 %v188, 7
        %v190 = vsub.s32 %v187, %v189
        %v191 = vrot.slane %v184, %v190
        %192 = vset.pattern.permute.xlu0 0
        %193 = vperm.xlu0 %192, %v191
        %v194 = vpop.permute.xlu0 %193
        %v195 = vlaneseq
        %v196 = vand.u32 %v195, 127
        %v197 = vlaneseq
        %v198 = vshrl.u32 %v197, 7
        %v199 = vsub.s32 %v196, %v198
        %v200 = vrot.slane %v194, %v199
        %v202 = vunpack.c.l.s4 1966171168
        %v203 = vunpack.c.0.s8 %v202
        %v204 = vlaneseq
        %v205 = vshrl.u32 %v204, 7
        %v206 = vsub.s32 %v203, %v205
        %v207 = vrot.slane %v200, %v206
        %v209 = vunpack.c.l.s4 1966171168
        %v210 = vunpack.c.0.s8 %v209
        %v211 = vlaneseq
        %v212 = vshrl.u32 %v211, 7
        %v213 = vsub.s32 %v210, %v212
        %v214 = vrot.slane %v207, %v213
        %v216 = vadd.f32 %v139, %v214
        %vm217 = vcmask 24576
        %218 = vst.msk [vmem:[#allocation2] sm:$0x1] %vm217, %v216
        // Predicated region
        $region29: #{conv2d_observer_forward.3} parent=23 // pred_check
          %p219 = pneg %p66
        $region30: #{conv2d_observer_forward.3} parent=23 // pred_check_branch
          %221 = sbr.rel (%p219) target = $region32
        $region31: #{conv2d_observer_forward.3} parent=23 // pred_region
          %s223 = ssub.s32 16, 16
          %224 = vsyncadd [#allocation3], %s223
          %s226 = sshll.u32 [#allocation2], 4
          %s227 = int_to_ptr.vmem [resolvable:$true] %s226
          %229 = dma.vmem_to_hbm [thread:$0]  %s227, 16, %s1, [#allocation3]
        $region32: #{conv2d_observer_forward.3} parent=23 // pred_fallthru
          _
        // Predicated region
        $region33: #{conv2d_observer_forward.3} parent=23 // pred_check
          %p230 = pneg %p66
        $region34: #{conv2d_observer_forward.3} parent=23 // pred_check_branch
          %232 = sbr.rel (%p230) target = $region36
        $region35: #{conv2d_observer_forward.3} parent=23 // pred_region
          %233 = dma.done [#allocation3], 16
        $region36: #{conv2d_observer_forward.3} parent=23 // pred_fallthru
          _
      $region24: #{conv2d_observer_forward.3} parent=5 // pred_fallthru
        _
      %p234 = scmp.le.s32.totalorder 2, %s8
      // Predicated region
      $region37: #{conv2d_observer_forward.3} parent=5 // pred_check
        %p235 = pneg %p234
      $region38: #{conv2d_observer_forward.3} parent=5 // pred_check_branch
        %237 = sbr.rel (%p235) target = $region40
      $region39: #{conv2d_observer_forward.3} parent=5 // pred_region
        %s238 = ssub.s32 %s8, 2
      $region40: #{conv2d_observer_forward.3} parent=5 // pred_fallthru
        _
    $region6: #{conv2d_observer_forward.3} parent=1 // loop_footer
      %s12 = sadd.s32 1, %s8
    $region7: #{conv2d_observer_forward.3} parent=1 // loop_footer_branch
      %7 = sbr.rel target = $region3
    $region8: #{conv2d_observer_forward.3} parent=1 // loop_exit
      _
    %239 = vsyncpa [#allocation3], 1
    %s240 = scalar_lea.sflag [#allocation3], 1
    %241 = vsyncpa %s240, 1

// kernel: conv2d_observer_forward.2
$region0: #{conv2d_observer_forward.2}
  #allocation0 [shape = 'u32[]', space=smem, size = 0x4, offset = 0x4, fixed_abs, tag = 'smem constant byte address 0x4 - core index']
  #allocation1 [shape = 'u32[144,128]{1,0:T(1,128)}', space=vmem, size = 0x12000, scoped, tag = 'internal scratch']
  #allocation2 [shape = 'f32[256,128]{1,0:T(8,128)}', space=vmem, size = 0x20000, scoped, tag = 'scratch operand']
  %s0 = inlined_call_operand.vmem [shape: f32[512,128], index: 0, kind: input, shape index: {}]
  %s1 = inlined_call_operand.vmem [shape: f32[128,128], index: 1, kind: input, shape index: {}]
  %s2 = inlined_call_operand.vmem [shape: f32[512,128], index: 2, kind: input, shape index: {}]
  %s3 = inlined_call_operand.vmem [shape: f32[512,128], index: 3, kind: output, shape index: {}]
  %s4 = sld [smem:[#allocation0]]
  $region53: #{conv2d_observer_forward.2} parent=0
    _
  %s6 = ssub.s32 1, %s4
  %s7 = scalar_select 0, %s6, %s4
  loop: start=0, step=1, limit=4
  $region2: #{conv2d_observer_forward.2} parent=0 // loop_pre_header
    _
  $region3: #{conv2d_observer_forward.2} parent=0 // loop_header
    %s9 = sphi 0, %s13
    %p10 = scmp.ge.s32.totalorder %s9, 4
    %s16 = sphi 0, %s28
    %s17 = sphi 0, %s24
    %s18 = sphi 0, %s16
    %s19 = sphi 0, %s17
    %s20 = sphi 0, %s18
    %s21 = sphi 0, %s19
    %s33 = sphi 0, %s35
    %s36 = sphi 0, %s33
    %s37 = sphi 0, %s36
    %s53 = sphi 0, %s37
    %s59 = sphi 0, %s61
    %s62 = sphi 0, %s59
    %s63 = sphi 0, %s62
    %s79 = sphi 0, %s63
    %s85 = sphi 0, %s87
    %s88 = sphi 0, %s85
    %s89 = sphi 0, %s88
    %s105 = sphi 0, %s89
    %s111 = sphi 0, %s113
    %s114 = sphi 0, %s111
    %s115 = sphi 0, %s114
    %s131 = sphi 0, %s115
  $region4: #{conv2d_observer_forward.2} parent=0 // loop_header_branch
    %12 = sbr.rel (%p10) target = $region8
  $region5: #{conv2d_observer_forward.2} parent=0 // loop_body
    %s14 = ssub.s32 %s9, 1
    %s15 = ssub.s32 %s9, 2
    %s22 = sadd.s32 1, %s17
    %p23 = scmp.ge.s32.totalorder %s22, 1
    %s24 = scalar_select %p23, 0, %s22
    %s25 = sadd.s32 1, %s16
    %s26 = scalar_select %p23, %s25, %s16
    %p27 = scmp.ge.s32.totalorder %s26, 2
    %s28 = scalar_select %p27, 0, %s26
    %s29 = ssub.s32 %s16, %s28
    %s30 = ssub.s32 %s17, %s24
    %s31 = sor.u32 %s29, %s30
    %p32 = scmp.eq.s32.totalorder %s31, 0
    %s34 = sadd.s32 %s33, 1
    %s35 = scalar_select %p32, %s33, %s34
    %p38 = pneg %p32
    %p39 = scmp.eq.s32.totalorder %s9, 1
    %p40 = por %p38, %p39
    %p41 = scmp.ne.s32.totalorder %s33, %s36
    %p42 = scmp.eq.s32.totalorder %s9, 0
    %p43 = por %p41, %p42
    %p44 = scmp.ne.s32.totalorder %s33, %s36
    %p45 = scmp.eq.s32.totalorder %s14, 1
    %p46 = por %p44, %p45
    %p47 = scmp.ne.s32.totalorder %s36, %s37
    %p48 = scmp.eq.s32.totalorder %s14, 0
    %p49 = por %p47, %p48
    %p50 = scmp.ne.s32.totalorder %s36, %s37
    %p51 = scmp.eq.s32.totalorder %s15, 1
    %p52 = por %p50, %p51
    %p54 = scmp.ne.s32.totalorder %s37, %s53
    %p55 = scmp.eq.s32.totalorder %s15, 0
    %p56 = por %p54, %p55
    %s57 = ssub.s32 %s17, %s24
    %p58 = scmp.eq.s32.totalorder %s57, 0
    %s60 = sadd.s32 %s59, 1
    %s61 = scalar_select %p58, %s59, %s60
    %p64 = pneg %p58
    %p65 = scmp.eq.s32.totalorder %s9, 1
    %p66 = por %p64, %p65
    %p67 = scmp.ne.s32.totalorder %s59, %s62
    %p68 = scmp.eq.s32.totalorder %s9, 0
    %p69 = por %p67, %p68
    %p70 = scmp.ne.s32.totalorder %s59, %s62
    %p71 = scmp.eq.s32.totalorder %s14, 1
    %p72 = por %p70, %p71
    %p73 = scmp.ne.s32.totalorder %s62, %s63
    %p74 = scmp.eq.s32.totalorder %s14, 0
    %p75 = por %p73, %p74
    %p76 = scmp.ne.s32.totalorder %s62, %s63
    %p77 = scmp.eq.s32.totalorder %s15, 1
    %p78 = por %p76, %p77
    %p80 = scmp.ne.s32.totalorder %s63, %s79
    %p81 = scmp.eq.s32.totalorder %s15, 0
    %p82 = por %p80, %p81
    %s83 = ssub.s32 %s16, %s28
    %p84 = scmp.eq.s32.totalorder %s83, 0
    %s86 = sadd.s32 %s85, 1
    %s87 = scalar_select %p84, %s85, %s86
    %p90 = pneg %p84
    %p91 = scmp.eq.s32.totalorder %s9, 1
    %p92 = por %p90, %p91
    %p93 = scmp.ne.s32.totalorder %s85, %s88
    %p94 = scmp.eq.s32.totalorder %s9, 0
    %p95 = por %p93, %p94
    %p96 = scmp.ne.s32.totalorder %s85, %s88
    %p97 = scmp.eq.s32.totalorder %s14, 1
    %p98 = por %p96, %p97
    %p99 = scmp.ne.s32.totalorder %s88, %s89
    %p100 = scmp.eq.s32.totalorder %s14, 0
    %p101 = por %p99, %p100
    %p102 = scmp.ne.s32.totalorder %s88, %s89
    %p103 = scmp.eq.s32.totalorder %s15, 1
    %p104 = por %p102, %p103
    %p106 = scmp.ne.s32.totalorder %s89, %s105
    %p107 = scmp.eq.s32.totalorder %s15, 0
    %p108 = por %p106, %p107
    %s109 = ssub.s32 %s16, %s28
    %p110 = scmp.eq.s32.totalorder %s109, 0
    %s112 = sadd.s32 %s111, 1
    %s113 = scalar_select %p110, %s111, %s112
    %p116 = pneg %p110
    %p117 = scmp.eq.s32.totalorder %s9, 1
    %p118 = por %p116, %p117
    %p119 = scmp.ne.s32.totalorder %s111, %s114
    %p120 = scmp.eq.s32.totalorder %s9, 0
    %p121 = por %p119, %p120
    %p122 = scmp.ne.s32.totalorder %s111, %s114
    %p123 = scmp.eq.s32.totalorder %s14, 1
    %p124 = por %p122, %p123
    %p125 = scmp.ne.s32.totalorder %s114, %s115
    %p126 = scmp.eq.s32.totalorder %s14, 0
    %p127 = por %p125, %p126
    %p128 = scmp.ne.s32.totalorder %s114, %s115
    %p129 = scmp.eq.s32.totalorder %s15, 1
    %p130 = por %p128, %p129
    %p132 = scmp.ne.s32.totalorder %s115, %s131
    %p133 = scmp.eq.s32.totalorder %s15, 0
    %p134 = por %p132, %p133
    %p135 = scmp.le.s32.totalorder 1, %s9
    %p136 = scmp.lt.s32.totalorder %s9, 3
    %p137 = pnand %p135, %p136
    %p138 = pneg %p137
    // Predicated region
    $region9: #{conv2d_observer_forward.2} parent=5 // pred_check
      _
    $region10: #{conv2d_observer_forward.2} parent=5 // pred_check_branch
      %140 = sbr.rel (%p137) target = $region12
    $region11: #{conv2d_observer_forward.2} parent=5 // pred_region
      %s141 = ssub.s32 %s9, 1
      // Predicated region
      $region13: #{conv2d_observer_forward.2} parent=11 // pred_check
        %p142 = pneg %p75
      $region14: #{conv2d_observer_forward.2} parent=11 // pred_check_branch
        %144 = sbr.rel (%p142) target = $region16
      $region15: #{conv2d_observer_forward.2} parent=11 // pred_region
        %s145 = smul.u32 16, %s19
        %p146 = scmp.lt.s32.totalorder %s145, 15
        %s147 = scalar_select %p146, %s145, 15
        %s148 = smul.addr %s147, 8
        %s149 = scalar_lea.vmem %s1, %s148
        %s150 = smul.u32 16, %s19
      $region16: #{conv2d_observer_forward.2} parent=11 // pred_fallthru
        _
    $region12: #{conv2d_observer_forward.2} parent=5 // pred_fallthru
      _
    %p151 = scmp.lt.s32.totalorder %s9, 2
    // Predicated region
    $region17: #{conv2d_observer_forward.2} parent=5 // pred_check
      %p152 = pneg %p151
    $region18: #{conv2d_observer_forward.2} parent=5 // pred_check_branch
      %154 = sbr.rel (%p152) target = $region20
    $region19: #{conv2d_observer_forward.2} parent=5 // pred_region
      // Predicated region
      $region21: #{conv2d_observer_forward.2} parent=19 // pred_check
        %p155 = pneg %p43
      $region22: #{conv2d_observer_forward.2} parent=19 // pred_check_branch
        %157 = sbr.rel (%p155) target = $region24
      $region23: #{conv2d_observer_forward.2} parent=19 // pred_region
        %s158 = smul.u32 32, %s16
        %p159 = scmp.lt.s32.totalorder %s158, 63
        %s160 = scalar_select %p159, %s158, 63
        %p161 = scmp.lt.s32.totalorder %s17, 0
        %s162 = scalar_select %p161, %s17, 0
        %s163 = sadd.s32 %s162, %s160
        %s164 = smul.addr %s163, 8
        %s165 = scalar_lea.vmem %s0, %s164
        %s166 = smul.u32 32, %s16
      $region24: #{conv2d_observer_forward.2} parent=19 // pred_fallthru
        _
      // Predicated region
      $region25: #{conv2d_observer_forward.2} parent=19 // pred_check
        %p167 = pneg %p95
      $region26: #{conv2d_observer_forward.2} parent=19 // pred_check_branch
        %169 = sbr.rel (%p167) target = $region28
      $region27: #{conv2d_observer_forward.2} parent=19 // pred_region
        %s170 = smul.u32 32, %s16
        %p171 = scmp.lt.s32.totalorder %s170, 63
        %s172 = scalar_select %p171, %s170, 63
        %s173 = smul.addr %s172, 8
        %s174 = scalar_lea.vmem %s2, %s173
        %s175 = smul.u32 32, %s16
      $region28: #{conv2d_observer_forward.2} parent=19 // pred_fallthru
        _
    $region20: #{conv2d_observer_forward.2} parent=5 // pred_fallthru
      _
    %p176 = scmp.le.s32.totalorder 1, %s9
    %p177 = scmp.lt.s32.totalorder %s9, 3
    %p178 = pnand %p176, %p177
    %p179 = pneg %p178
    // Predicated region
    $region29: #{conv2d_observer_forward.2} parent=5 // pred_check
      _
    $region30: #{conv2d_observer_forward.2} parent=5 // pred_check_branch
      %181 = sbr.rel (%p178) target = $region32
    $region31: #{conv2d_observer_forward.2} parent=5 // pred_region
      %s182 = ssub.s32 %s9, 1
      %s183 = smul.u32 32, %s18
      %p184 = scmp.lt.s32.totalorder %s183, 63
      %s185 = scalar_select %p184, %s183, 63
      %p186 = scmp.lt.s32.totalorder %s19, 0
      %s187 = scalar_select %p186, %s19, 0
      %s188 = sadd.s32 %s187, %s185
      %s189 = smul.addr %s188, 8
      %s190 = scalar_lea.vmem %s0, %s189
      %p191 = pneg %p49
      %p192 = pneg %p46
      %s193 = smul.u32 16, %s19
      %p194 = scmp.lt.s32.totalorder %s193, 15
      %s195 = scalar_select %p194, %s193, 15
      %s196 = smul.addr %s195, 8
      %s197 = scalar_lea.vmem %s1, %s196
      %p198 = pneg %p75
      %p199 = pneg %p72
      %s200 = smul.u32 32, %s18
      %p201 = scmp.lt.s32.totalorder %s200, 63
      %s202 = scalar_select %p201, %s200, 63
      %s203 = smul.addr %s202, 8
      %s204 = scalar_lea.vmem %s2, %s203
      %p205 = pneg %p101
      %p206 = pneg %p98
      %p207 = pneg %p127
      %p208 = pneg %p124
      %s209 = smul.u32 32, %s18
      %p210 = scmp.lt.s32.totalorder %s209, 63
      %s211 = scalar_select %p210, %s209, 63
      %s212 = smul.addr %s211, 8
      %s213 = scalar_lea.vmem %s3, %s212
      %s214 = smul.u32 32, %s18
      %p215 = scmp.lt.s32.totalorder %s214, 63
      %s216 = scalar_select %p215, %s214, 63
      %p217 = scmp.lt.s32.totalorder %s19, 0
      %s218 = scalar_select %p217, %s19, 0
      %s219 = sadd.s32 %s218, %s216
      %s220 = smul.addr %s219, 8
      %s221 = scalar_lea.vmem %s0, %s220
      %s222 = smul.u32 32, %s18
      %s223 = smul.u32 16, %s19
      %p224 = scmp.lt.s32.totalorder %s223, 15
      %s225 = scalar_select %p224, %s223, 15
      %s226 = smul.addr %s225, 8
      %s227 = scalar_lea.vmem %s1, %s226
      %s228 = smul.u32 16, %s19
      %s229 = smul.u32 32, %s18
      %p230 = scmp.lt.s32.totalorder %s229, 63
      %s231 = scalar_select %p230, %s229, 63
      %s232 = smul.addr %s231, 8
      %s233 = scalar_lea.vmem %s2, %s232
      %s234 = smul.u32 32, %s18
      %s235 = smul.u32 32, %s18
      %p236 = scmp.lt.s32.totalorder %s235, 63
      %s237 = scalar_select %p236, %s235, 63
      %s238 = smul.addr %s237, 8
      %s239 = scalar_lea.vmem %s3, %s238
      %s240 = smul.u32 32, %s18
      %p241 = scmp.eq.s32.totalorder %s19, 0
      // Predicated region
      $region33: #{conv2d_observer_forward.2} parent=31 // pred_check
        %p242 = pneg %p241
      $region34: #{conv2d_observer_forward.2} parent=31 // pred_check_branch
        %244 = sbr.rel (%p242) target = $region36
      $region35: #{conv2d_observer_forward.2} parent=31 // pred_region
        %245 = vst [vmem:[#allocation2] sm:$0xff] 0.0
        %246 = vst [vmem:[#allocation2 + $0x8] sm:$0xff] 0.0
        %247 = vst [vmem:[#allocation2 + $0x10] sm:$0xff] 0.0
        %248 = vst [vmem:[#allocation2 + $0x18] sm:$0xff] 0.0
        %249 = vst [vmem:[#allocation2 + $0x20] sm:$0xff] 0.0
        %250 = vst [vmem:[#allocation2 + $0x28] sm:$0xff] 0.0
        %251 = vst [vmem:[#allocation2 + $0x30] sm:$0xff] 0.0
        %252 = vst [vmem:[#allocation2 + $0x38] sm:$0xff] 0.0
        %253 = vst [vmem:[#allocation2 + $0x40] sm:$0xff] 0.0
        %254 = vst [vmem:[#allocation2 + $0x48] sm:$0xff] 0.0
        %255 = vst [vmem:[#allocation2 + $0x50] sm:$0xff] 0.0
        %256 = vst [vmem:[#allocation2 + $0x58] sm:$0xff] 0.0
        %257 = vst [vmem:[#allocation2 + $0x60] sm:$0xff] 0.0
        %258 = vst [vmem:[#allocation2 + $0x68] sm:$0xff] 0.0
        %259 = vst [vmem:[#allocation2 + $0x70] sm:$0xff] 0.0
        %260 = vst [vmem:[#allocation2 + $0x78] sm:$0xff] 0.0
        %261 = vst [vmem:[#allocation2 + $0x80] sm:$0xff] 0.0
        %262 = vst [vmem:[#allocation2 + $0x88] sm:$0xff] 0.0
        %263 = vst [vmem:[#allocation2 + $0x90] sm:$0xff] 0.0
        %264 = vst [vmem:[#allocation2 + $0x98] sm:$0xff] 0.0
        %265 = vst [vmem:[#allocation2 + $0xa0] sm:$0xff] 0.0
        %266 = vst [vmem:[#allocation2 + $0xa8] sm:$0xff] 0.0
        %267 = vst [vmem:[#allocation2 + $0xb0] sm:$0xff] 0.0
        %268 = vst [vmem:[#allocation2 + $0xb8] sm:$0xff] 0.0
        %269 = vst [vmem:[#allocation2 + $0xc0] sm:$0xff] 0.0
        %270 = vst [vmem:[#allocation2 + $0xc8] sm:$0xff] 0.0
        %271 = vst [vmem:[#allocation2 + $0xd0] sm:$0xff] 0.0
        %272 = vst [vmem:[#allocation2 + $0xd8] sm:$0xff] 0.0
        %273 = vst [vmem:[#allocation2 + $0xe0] sm:$0xff] 0.0
        %274 = vst [vmem:[#allocation2 + $0xe8] sm:$0xff] 0.0
        %275 = vst [vmem:[#allocation2 + $0xf0] sm:$0xff] 0.0
        %276 = vst [vmem:[#allocation2 + $0xf8] sm:$0xff] 0.0
      $region36: #{conv2d_observer_forward.2} parent=31 // pred_fallthru
        _
      %v277 = vld [vmem:[#allocation2] sm:$0xff]
      %v278 = vld [vmem:[#allocation2 + $0x8] sm:$0xff]
      %v279 = vld [vmem:[#allocation2 + $0x10] sm:$0xff]
      %v280 = vld [vmem:[#allocation2 + $0x18] sm:$0xff]
      %v281 = vld [vmem:[#allocation2 + $0x20] sm:$0xff]
      %v282 = vld [vmem:[#allocation2 + $0x28] sm:$0xff]
      %v283 = vld [vmem:[#allocation2 + $0x30] sm:$0xff]
      %v284 = vld [vmem:[#allocation2 + $0x38] sm:$0xff]
      %v285 = vld [vmem:[#allocation2 + $0x40] sm:$0xff]
      %v286 = vld [vmem:[#allocation2 + $0x48] sm:$0xff]
      %v287 = vld [vmem:[#allocation2 + $0x50] sm:$0xff]
      %v288 = vld [vmem:[#allocation2 + $0x58] sm:$0xff]
      %v289 = vld [vmem:[#allocation2 + $0x60] sm:$0xff]
      %v290 = vld [vmem:[#allocation2 + $0x68] sm:$0xff]
      %v291 = vld [vmem:[#allocation2 + $0x70] sm:$0xff]
      %v292 = vld [vmem:[#allocation2 + $0x78] sm:$0xff]
      %v293 = vld [vmem:[#allocation2 + $0x80] sm:$0xff]
      %v294 = vld [vmem:[#allocation2 + $0x88] sm:$0xff]
      %v295 = vld [vmem:[#allocation2 + $0x90] sm:$0xff]
      %v296 = vld [vmem:[#allocation2 + $0x98] sm:$0xff]
      %v297 = vld [vmem:[#allocation2 + $0xa0] sm:$0xff]
      %v298 = vld [vmem:[#allocation2 + $0xa8] sm:$0xff]
      %v299 = vld [vmem:[#allocation2 + $0xb0] sm:$0xff]
      %v300 = vld [vmem:[#allocation2 + $0xb8] sm:$0xff]
      %v301 = vld [vmem:[#allocation2 + $0xc0] sm:$0xff]
      %v302 = vld [vmem:[#allocation2 + $0xc8] sm:$0xff]
      %v303 = vld [vmem:[#allocation2 + $0xd0] sm:$0xff]
      %v304 = vld [vmem:[#allocation2 + $0xd8] sm:$0xff]
      %v305 = vld [vmem:[#allocation2 + $0xe0] sm:$0xff]
      %v306 = vld [vmem:[#allocation2 + $0xe8] sm:$0xff]
      %v307 = vld [vmem:[#allocation2 + $0xf0] sm:$0xff]
      %v308 = vld [vmem:[#allocation2 + $0xf8] sm:$0xff]
      %v309 = vld [vmem:[%s221] sm:$0xff]
      %v310 = vld [vmem:[%s221 + $0x8] sm:$0xff]
      %v311 = vld [vmem:[%s221 + $0x10] sm:$0xff]
      %v312 = vld [vmem:[%s221 + $0x18] sm:$0xff]
      %v313 = vld [vmem:[%s221 + $0x20] sm:$0xff]
      %v314 = vld [vmem:[%s221 + $0x28] sm:$0xff]
      %v315 = vld [vmem:[%s221 + $0x30] sm:$0xff]
      %v316 = vld [vmem:[%s221 + $0x38] sm:$0xff]
      %v317 = vld [vmem:[%s221 + $0x40] sm:$0xff]
      %v318 = vld [vmem:[%s221 + $0x48] sm:$0xff]
      %v319 = vld [vmem:[%s221 + $0x50] sm:$0xff]
      %v320 = vld [vmem:[%s221 + $0x58] sm:$0xff]
      %v321 = vld [vmem:[%s221 + $0x60] sm:$0xff]
      %v322 = vld [vmem:[%s221 + $0x68] sm:$0xff]
      %v323 = vld [vmem:[%s221 + $0x70] sm:$0xff]
      %v324 = vld [vmem:[%s221 + $0x78] sm:$0xff]
      %v325 = vld [vmem:[%s221 + $0x80] sm:$0xff]
      %v326 = vld [vmem:[%s221 + $0x88] sm:$0xff]
      %v327 = vld [vmem:[%s221 + $0x90] sm:$0xff]
      %v328 = vld [vmem:[%s221 + $0x98] sm:$0xff]
      %v329 = vld [vmem:[%s221 + $0xa0] sm:$0xff]
      %v330 = vld [vmem:[%s221 + $0xa8] sm:$0xff]
      %v331 = vld [vmem:[%s221 + $0xb0] sm:$0xff]
      %v332 = vld [vmem:[%s221 + $0xb8] sm:$0xff]
      %v333 = vld [vmem:[%s221 + $0xc0] sm:$0xff]
      %v334 = vld [vmem:[%s221 + $0xc8] sm:$0xff]
      %v335 = vld [vmem:[%s221 + $0xd0] sm:$0xff]
      %v336 = vld [vmem:[%s221 + $0xd8] sm:$0xff]
      %v337 = vld [vmem:[%s221 + $0xe0] sm:$0xff]
      %v338 = vld [vmem:[%s221 + $0xe8] sm:$0xff]
      %v339 = vld [vmem:[%s221 + $0xf0] sm:$0xff]
      %v340 = vld [vmem:[%s221 + $0xf8] sm:$0xff]
      %v341 = vld [vmem:[%s227] sm:$0xff]
      %v342 = vld [vmem:[%s227 + $0x8] sm:$0xff]
      %v343 = vld [vmem:[%s227 + $0x10] sm:$0xff]
      %v344 = vld [vmem:[%s227 + $0x18] sm:$0xff]
      %v345 = vld [vmem:[%s227 + $0x20] sm:$0xff]
      %v346 = vld [vmem:[%s227 + $0x28] sm:$0xff]
      %v347 = vld [vmem:[%s227 + $0x30] sm:$0xff]
      %v348 = vld [vmem:[%s227 + $0x38] sm:$0xff]
      %v349 = vld [vmem:[%s227 + $0x40] sm:$0xff]
      %v350 = vld [vmem:[%s227 + $0x48] sm:$0xff]
      %v351 = vld [vmem:[%s227 + $0x50] sm:$0xff]
      %v352 = vld [vmem:[%s227 + $0x58] sm:$0xff]
      %v353 = vld [vmem:[%s227 + $0x60] sm:$0xff]
      %v354 = vld [vmem:[%s227 + $0x68] sm:$0xff]
      %v355 = vld [vmem:[%s227 + $0x70] sm:$0xff]
      %v356 = vld [vmem:[%s227 + $0x78] sm:$0xff]
      %357 = vmatprep.subr.mxu0 0.0
      %358 = vmatpush1.msra.mxu0 %v356
      %359 = vmatprep.subr.mxu0 0.0
      %360 = vmatpush1.msra.mxu0 %v355
      %361 = vmatprep.subr.mxu0 0.0
      %362 = vmatpush1.msra.mxu0 %v354
      %363 = vmatprep.subr.mxu0 0.0
      %364 = vmatpush1.msra.mxu0 %v353
      %365 = vmatprep.subr.mxu0 0.0
      %366 = vmatpush1.msra.mxu0 %v352
      %367 = vmatprep.subr.mxu0 0.0
      %368 = vmatpush1.msra.mxu0 %v351
      %369 = vmatprep.subr.mxu0 0.0
      %370 = vmatpush1.msra.mxu0 %v350
      %371 = vmatprep.subr.mxu0 0.0
      %372 = vmatpush1.msra.mxu0 %v349
      %373 = vmatprep.subr.mxu0 0.0
      %374 = vmatpush1.msra.mxu0 %v348
      %375 = vmatprep.subr.mxu0 0.0
      %376 = vmatpush1.msra.mxu0 %v347
      %377 = vmatprep.subr.mxu0 0.0
      %378 = vmatpush1.msra.mxu0 %v346
      %379 = vmatprep.subr.mxu0 0.0
      %380 = vmatpush1.msra.mxu0 %v345
      %381 = vmatprep.subr.mxu0 0.0
      %382 = vmatpush1.msra.mxu0 %v344
      %383 = vmatprep.subr.mxu0 0.0
      %384 = vmatpush1.msra.mxu0 %v343
      %385 = vmatprep.subr.mxu0 0.0
      %386 = vmatpush1.msra.mxu0 %v342
      %387 = vmatprep.subr.mxu0 0.0
      %388 = vmatpush1.msra.mxu0 %v341
      %389 = vmatprep.subr.mxu0 0.0
      %390 = vmatpush2.msra.mxu0 0.0
      %391 = vmatprep.subr.mxu0 0.0
      %392 = vmatpush2.msra.mxu0 0.0
      %393 = vmatprep.subr.mxu0 0.0
      %394 = vmatpush2.msra.mxu0 0.0
      %395 = vmatprep.subr.mxu0 0.0
      %396 = vmatpush2.msra.mxu0 0.0
      %397 = vmatprep.subr.mxu0 0.0
      %398 = vmatpush2.msra.mxu0 0.0
      %399 = vmatprep.subr.mxu0 0.0
      %400 = vmatpush2.msra.mxu0 0.0
      %401 = vmatprep.subr.mxu0 0.0
      %402 = vmatpush2.msra.mxu0 0.0
      %403 = vmatprep.subr.mxu0 0.0
      %404 = vmatpush2.msra.mxu0 0.0
      %405 = vmatprep.subr.mxu0 0.0
      %406 = vmatpush2.msra.mxu0 0.0
      %407 = vmatprep.subr.mxu0 0.0
      %408 = vmatpush2.msra.mxu0 0.0
      %409 = vmatprep.subr.mxu0 0.0
      %410 = vmatpush2.msra.mxu0 0.0
      %411 = vmatprep.subr.mxu0 0.0
      %412 = vmatpush2.msra.mxu0 0.0
      %413 = vmatprep.subr.mxu0 0.0
      %414 = vmatpush2.msra.mxu0 0.0
      %415 = vmatprep.subr.mxu0 0.0
      %416 = vmatpush2.msra.mxu0 0.0
      %417 = vmatprep.subr.mxu0 0.0
      %418 = vmatpush2.msra.mxu0 0.0
      %419 = vmatprep.subr.mxu0 0.0
      %420 = vmatpush2.msra.mxu0 0.0
      %421 = vmatprep.mubr.f32.mxu0 0.0
      %422 = vmatmul.mubr.f32.gmra.mxu0 %v309
      %v423 = vpop.f32.mrf.mxu0
      %v424 = vadd.f32 0.0, %v423
      %v425 = vpop.f32.mrf.mxu0
      %426 = vmatprep.mubr.f32.mxu0 0.0
      %427 = vmatmul.mubr.f32.gmra.mxu0 %v310
      %v428 = vpop.f32.mrf.mxu0
      %v429 = vadd.f32 0.0, %v428
      %v430 = vpop.f32.mrf.mxu0
      %431 = vmatprep.mubr.f32.mxu0 0.0
      %432 = vmatmul.mubr.f32.gmra.mxu0 %v311
      %v433 = vpop.f32.mrf.mxu0
      %v434 = vadd.f32 0.0, %v433
      %v435 = vpop.f32.mrf.mxu0
      %436 = vmatprep.mubr.f32.mxu0 0.0
      %437 = vmatmul.mubr.f32.gmra.mxu0 %v312
      %v438 = vpop.f32.mrf.mxu0
      %v439 = vadd.f32 0.0, %v438
      %v440 = vpop.f32.mrf.mxu0
      %441 = vmatprep.mubr.f32.mxu0 0.0
      %442 = vmatmul.mubr.f32.gmra.mxu0 %v313
      %v443 = vpop.f32.mrf.mxu0
      %v444 = vadd.f32 0.0, %v443
      %v445 = vpop.f32.mrf.mxu0
      %446 = vmatprep.mubr.f32.mxu0 0.0
      %447 = vmatmul.mubr.f32.gmra.mxu0 %v314
      %v448 = vpop.f32.mrf.mxu0
      %v449 = vadd.f32 0.0, %v448
      %v450 = vpop.f32.mrf.mxu0
      %451 = vmatprep.mubr.f32.mxu0 0.0
      %452 = vmatmul.mubr.f32.gmra.mxu0 %v315
      %v453 = vpop.f32.mrf.mxu0
      %v454 = vadd.f32 0.0, %v453
      %v455 = vpop.f32.mrf.mxu0
      %456 = vmatprep.mubr.f32.mxu0 0.0
      %457 = vmatmul.mubr.f32.gmra.mxu0 %v316
      %v458 = vpop.f32.mrf.mxu0
      %v459 = vadd.f32 0.0, %v458
      %v460 = vpop.f32.mrf.mxu0
      %461 = vmatprep.mubr.f32.mxu0 0.0
      %462 = vmatmul.mubr.f32.gmra.mxu0 %v317
      %v463 = vpop.f32.mrf.mxu0
      %v464 = vadd.f32 0.0, %v463
      %v465 = vpop.f32.mrf.mxu0
      %466 = vmatprep.mubr.f32.mxu0 0.0
      %467 = vmatmul.mubr.f32.gmra.mxu0 %v318
      %v468 = vpop.f32.mrf.mxu0
      %v469 = vadd.f32 0.0, %v468
      %v470 = vpop.f32.mrf.mxu0
      %471 = vmatprep.mubr.f32.mxu0 0.0
      %472 = vmatmul.mubr.f32.gmra.mxu0 %v319
      %v473 = vpop.f32.mrf.mxu0
      %v474 = vadd.f32 0.0, %v473
      %v475 = vpop.f32.mrf.mxu0
      %476 = vmatprep.mubr.f32.mxu0 0.0
      %477 = vmatmul.mubr.f32.gmra.mxu0 %v320
      %v478 = vpop.f32.mrf.mxu0
      %v479 = vadd.f32 0.0, %v478
      %v480 = vpop.f32.mrf.mxu0
      %481 = vmatprep.mubr.f32.mxu0 0.0
      %482 = vmatmul.mubr.f32.gmra.mxu0 %v321
      %v483 = vpop.f32.mrf.mxu0
      %v484 = vadd.f32 0.0, %v483
      %v485 = vpop.f32.mrf.mxu0
      %486 = vmatprep.mubr.f32.mxu0 0.0
      %487 = vmatmul.mubr.f32.gmra.mxu0 %v322
      %v488 = vpop.f32.mrf.mxu0
      %v489 = vadd.f32 0.0, %v488
      %v490 = vpop.f32.mrf.mxu0
      %491 = vmatprep.mubr.f32.mxu0 0.0
      %492 = vmatmul.mubr.f32.gmra.mxu0 %v323
      %v493 = vpop.f32.mrf.mxu0
      %v494 = vadd.f32 0.0, %v493
      %v495 = vpop.f32.mrf.mxu0
      %496 = vmatprep.mubr.f32.mxu0 0.0
      %497 = vmatmul.mubr.f32.gmra.mxu0 %v324
      %v498 = vpop.f32.mrf.mxu0
      %v499 = vadd.f32 0.0, %v498
      %v500 = vpop.f32.mrf.mxu0
      %501 = vmatprep.mubr.f32.mxu0 0.0
      %502 = vmatmul.mubr.f32.gmra.mxu0 %v325
      %v503 = vpop.f32.mrf.mxu0
      %v504 = vadd.f32 0.0, %v503
      %v505 = vpop.f32.mrf.mxu0
      %506 = vmatprep.mubr.f32.mxu0 0.0
      %507 = vmatmul.mubr.f32.gmra.mxu0 %v326
      %v508 = vpop.f32.mrf.mxu0
      %v509 = vadd.f32 0.0, %v508
      %v510 = vpop.f32.mrf.mxu0
      %511 = vmatprep.mubr.f32.mxu0 0.0
      %512 = vmatmul.mubr.f32.gmra.mxu0 %v327
      %v513 = vpop.f32.mrf.mxu0
      %v514 = vadd.f32 0.0, %v513
      %v515 = vpop.f32.mrf.mxu0
      %516 = vmatprep.mubr.f32.mxu0 0.0
      %517 = vmatmul.mubr.f32.gmra.mxu0 %v328
      %v518 = vpop.f32.mrf.mxu0
      %v519 = vadd.f32 0.0, %v518
      %v520 = vpop.f32.mrf.mxu0
      %521 = vmatprep.mubr.f32.mxu0 0.0
      %522 = vmatmul.mubr.f32.gmra.mxu0 %v329
      %v523 = vpop.f32.mrf.mxu0
      %v524 = vadd.f32 0.0, %v523
      %v525 = vpop.f32.mrf.mxu0
      %526 = vmatprep.mubr.f32.mxu0 0.0
      %527 = vmatmul.mubr.f32.gmra.mxu0 %v330
      %v528 = vpop.f32.mrf.mxu0
      %v529 = vadd.f32 0.0, %v528
      %v530 = vpop.f32.mrf.mxu0
      %531 = vmatprep.mubr.f32.mxu0 0.0
      %532 = vmatmul.mubr.f32.gmra.mxu0 %v331
      %v533 = vpop.f32.mrf.mxu0
      %v534 = vadd.f32 0.0, %v533
      %v535 = vpop.f32.mrf.mxu0
      %536 = vmatprep.mubr.f32.mxu0 0.0
      %537 = vmatmul.mubr.f32.gmra.mxu0 %v332
      %v538 = vpop.f32.mrf.mxu0
      %v539 = vadd.f32 0.0, %v538
      %v540 = vpop.f32.mrf.mxu0
      %541 = vmatprep.mubr.f32.mxu0 0.0
      %542 = vmatmul.mubr.f32.gmra.mxu0 %v333
      %v543 = vpop.f32.mrf.mxu0
      %v544 = vadd.f32 0.0, %v543
      %v545 = vpop.f32.mrf.mxu0
      %546 = vmatprep.mubr.f32.mxu0 0.0
      %547 = vmatmul.mubr.f32.gmra.mxu0 %v334
      %v548 = vpop.f32.mrf.mxu0
      %v549 = vadd.f32 0.0, %v548
      %v550 = vpop.f32.mrf.mxu0
      %551 = vmatprep.mubr.f32.mxu0 0.0
      %552 = vmatmul.mubr.f32.gmra.mxu0 %v335
      %v553 = vpop.f32.mrf.mxu0
      %v554 = vadd.f32 0.0, %v553
      %v555 = vpop.f32.mrf.mxu0
      %556 = vmatprep.mubr.f32.mxu0 0.0
      %557 = vmatmul.mubr.f32.gmra.mxu0 %v336
      %v558 = vpop.f32.mrf.mxu0
      %v559 = vadd.f32 0.0, %v558
      %v560 = vpop.f32.mrf.mxu0
      %561 = vmatprep.mubr.f32.mxu0 0.0
      %562 = vmatmul.mubr.f32.gmra.mxu0 %v337
      %v563 = vpop.f32.mrf.mxu0
      %v564 = vadd.f32 0.0, %v563
      %v565 = vpop.f32.mrf.mxu0
      %566 = vmatprep.mubr.f32.mxu0 0.0
      %567 = vmatmul.mubr.f32.gmra.mxu0 %v338
      %v568 = vpop.f32.mrf.mxu0
      %v569 = vadd.f32 0.0, %v568
      %v570 = vpop.f32.mrf.mxu0
      %571 = vmatprep.mubr.f32.mxu0 0.0
      %572 = vmatmul.mubr.f32.gmra.mxu0 %v339
      %v573 = vpop.f32.mrf.mxu0
      %v574 = vadd.f32 0.0, %v573
      %v575 = vpop.f32.mrf.mxu0
      %576 = vmatprep.mubr.f32.mxu0 0.0
      %577 = vmatmul.mubr.f32.gmra.mxu0 %v340
      %v578 = vpop.f32.mrf.mxu0
      %v579 = vadd.f32 0.0, %v578
      %v580 = vpop.f32.mrf.mxu0
      %581 = vdwg.mxu0
      %v582 = vadd.f32 %v277, %v424
      %v583 = vadd.f32 %v278, %v429
      %v584 = vadd.f32 %v279, %v434
      %v585 = vadd.f32 %v280, %v439
      %v586 = vadd.f32 %v281, %v444
      %v587 = vadd.f32 %v282, %v449
      %v588 = vadd.f32 %v283, %v454
      %v589 = vadd.f32 %v284, %v459
      %v590 = vadd.f32 %v285, %v464
      %v591 = vadd.f32 %v286, %v469
      %v592 = vadd.f32 %v287, %v474
      %v593 = vadd.f32 %v288, %v479
      %v594 = vadd.f32 %v289, %v484
      %v595 = vadd.f32 %v290, %v489
      %v596 = vadd.f32 %v291, %v494
      %v597 = vadd.f32 %v292, %v499
      %v598 = vadd.f32 %v293, %v504
      %v599 = vadd.f32 %v294, %v509
      %v600 = vadd.f32 %v295, %v514
      %v601 = vadd.f32 %v296, %v519
      %v602 = vadd.f32 %v297, %v524
      %v603 = vadd.f32 %v298, %v529
      %v604 = vadd.f32 %v299, %v534
      %v605 = vadd.f32 %v300, %v539
      %v606 = vadd.f32 %v301, %v544
      %v607 = vadd.f32 %v302, %v549
      %v608 = vadd.f32 %v303, %v554
      %v609 = vadd.f32 %v304, %v559
      %v610 = vadd.f32 %v305, %v564
      %v611 = vadd.f32 %v306, %v569
      %v612 = vadd.f32 %v307, %v574
      %v613 = vadd.f32 %v308, %v579
      %614 = vst [vmem:[#allocation2] sm:$0xff] %v582
      %615 = vst [vmem:[#allocation2 + $0x8] sm:$0xff] %v583
      %616 = vst [vmem:[#allocation2 + $0x10] sm:$0xff] %v584
      %617 = vst [vmem:[#allocation2 + $0x18] sm:$0xff] %v585
      %618 = vst [vmem:[#allocation2 + $0x20] sm:$0xff] %v586
      %619 = vst [vmem:[#allocation2 + $0x28] sm:$0xff] %v587
      %620 = vst [vmem:[#allocation2 + $0x30] sm:$0xff] %v588
      %621 = vst [vmem:[#allocation2 + $0x38] sm:$0xff] %v589
      %622 = vst [vmem:[#allocation2 + $0x40] sm:$0xff] %v590
      %623 = vst [vmem:[#allocation2 + $0x48] sm:$0xff] %v591
      %624 = vst [vmem:[#allocation2 + $0x50] sm:$0xff] %v592
      %625 = vst [vmem:[#allocation2 + $0x58] sm:$0xff] %v593
      %626 = vst [vmem:[#allocation2 + $0x60] sm:$0xff] %v594
      %627 = vst [vmem:[#allocation2 + $0x68] sm:$0xff] %v595
      %628 = vst [vmem:[#allocation2 + $0x70] sm:$0xff] %v596
      %629 = vst [vmem:[#allocation2 + $0x78] sm:$0xff] %v597
      %630 = vst [vmem:[#allocation2 + $0x80] sm:$0xff] %v598
      %631 = vst [vmem:[#allocation2 + $0x88] sm:$0xff] %v599
      %632 = vst [vmem:[#allocation2 + $0x90] sm:$0xff] %v600
      %633 = vst [vmem:[#allocation2 + $0x98] sm:$0xff] %v601
      %634 = vst [vmem:[#allocation2 + $0xa0] sm:$0xff] %v602
      %635 = vst [vmem:[#allocation2 + $0xa8] sm:$0xff] %v603
      %636 = vst [vmem:[#allocation2 + $0xb0] sm:$0xff] %v604
      %637 = vst [vmem:[#allocation2 + $0xb8] sm:$0xff] %v605
      %638 = vst [vmem:[#allocation2 + $0xc0] sm:$0xff] %v606
      %639 = vst [vmem:[#allocation2 + $0xc8] sm:$0xff] %v607
      %640 = vst [vmem:[#allocation2 + $0xd0] sm:$0xff] %v608
      %641 = vst [vmem:[#allocation2 + $0xd8] sm:$0xff] %v609
      %642 = vst [vmem:[#allocation2 + $0xe0] sm:$0xff] %v610
      %643 = vst [vmem:[#allocation2 + $0xe8] sm:$0xff] %v611
      %644 = vst [vmem:[#allocation2 + $0xf0] sm:$0xff] %v612
      %645 = vst [vmem:[#allocation2 + $0xf8] sm:$0xff] %v613
      // Predicated region
      $region37: #{conv2d_observer_forward.2} parent=31 // pred_check
        %p646 = pneg %p241
      $region38: #{conv2d_observer_forward.2} parent=31 // pred_check_branch
        %648 = sbr.rel (%p646) target = $region40
      $region39: #{conv2d_observer_forward.2} parent=31 // pred_region
        %v649 = vld [vmem:[#allocation2] sm:$0xff]
        %v650 = vld [vmem:[#allocation2 + $0x8] sm:$0xff]
        %v651 = vld [vmem:[#allocation2 + $0x10] sm:$0xff]
        %v652 = vld [vmem:[#allocation2 + $0x18] sm:$0xff]
        %v653 = vld [vmem:[#allocation2 + $0x20] sm:$0xff]
        %v654 = vld [vmem:[#allocation2 + $0x28] sm:$0xff]
        %v655 = vld [vmem:[#allocation2 + $0x30] sm:$0xff]
        %v656 = vld [vmem:[#allocation2 + $0x38] sm:$0xff]
        %v657 = vld [vmem:[#allocation2 + $0x40] sm:$0xff]
        %v658 = vld [vmem:[#allocation2 + $0x48] sm:$0xff]
        %v659 = vld [vmem:[#allocation2 + $0x50] sm:$0xff]
        %v660 = vld [vmem:[#allocation2 + $0x58] sm:$0xff]
        %v661 = vld [vmem:[#allocation2 + $0x60] sm:$0xff]
        %v662 = vld [vmem:[#allocation2 + $0x68] sm:$0xff]
        %v663 = vld [vmem:[#allocation2 + $0x70] sm:$0xff]
        %v664 = vld [vmem:[#allocation2 + $0x78] sm:$0xff]
        %v665 = vld [vmem:[#allocation2 + $0x80] sm:$0xff]
        %v666 = vld [vmem:[#allocation2 + $0x88] sm:$0xff]
        %v667 = vld [vmem:[#allocation2 + $0x90] sm:$0xff]
        %v668 = vld [vmem:[#allocation2 + $0x98] sm:$0xff]
        %v669 = vld [vmem:[#allocation2 + $0xa0] sm:$0xff]
        %v670 = vld [vmem:[#allocation2 + $0xa8] sm:$0xff]
        %v671 = vld [vmem:[#allocation2 + $0xb0] sm:$0xff]
        %v672 = vld [vmem:[#allocation2 + $0xb8] sm:$0xff]
        %v673 = vld [vmem:[#allocation2 + $0xc0] sm:$0xff]
        %v674 = vld [vmem:[#allocation2 + $0xc8] sm:$0xff]
        %v675 = vld [vmem:[#allocation2 + $0xd0] sm:$0xff]
        %v676 = vld [vmem:[#allocation2 + $0xd8] sm:$0xff]
        %v677 = vld [vmem:[#allocation2 + $0xe0] sm:$0xff]
        %v678 = vld [vmem:[#allocation2 + $0xe8] sm:$0xff]
        %v679 = vld [vmem:[#allocation2 + $0xf0] sm:$0xff]
        %v680 = vld [vmem:[#allocation2 + $0xf8] sm:$0xff]
        %v681 = vld [vmem:[%s233] sm:$0xff]
        %v682 = vld [vmem:[%s233 + $0x8] sm:$0xff]
        %v683 = vld [vmem:[%s233 + $0x10] sm:$0xff]
        %v684 = vld [vmem:[%s233 + $0x18] sm:$0xff]
        %v685 = vld [vmem:[%s233 + $0x20] sm:$0xff]
        %v686 = vld [vmem:[%s233 + $0x28] sm:$0xff]
        %v687 = vld [vmem:[%s233 + $0x30] sm:$0xff]
        %v688 = vld [vmem:[%s233 + $0x38] sm:$0xff]
        %v689 = vld [vmem:[%s233 + $0x40] sm:$0xff]
        %v690 = vld [vmem:[%s233 + $0x48] sm:$0xff]
        %v691 = vld [vmem:[%s233 + $0x50] sm:$0xff]
        %v692 = vld [vmem:[%s233 + $0x58] sm:$0xff]
        %v693 = vld [vmem:[%s233 + $0x60] sm:$0xff]
        %v694 = vld [vmem:[%s233 + $0x68] sm:$0xff]
        %v695 = vld [vmem:[%s233 + $0x70] sm:$0xff]
        %v696 = vld [vmem:[%s233 + $0x78] sm:$0xff]
        %v697 = vld [vmem:[%s233 + $0x80] sm:$0xff]
        %v698 = vld [vmem:[%s233 + $0x88] sm:$0xff]
        %v699 = vld [vmem:[%s233 + $0x90] sm:$0xff]
        %v700 = vld [vmem:[%s233 + $0x98] sm:$0xff]
        %v701 = vld [vmem:[%s233 + $0xa0] sm:$0xff]
        %v702 = vld [vmem:[%s233 + $0xa8] sm:$0xff]
        %v703 = vld [vmem:[%s233 + $0xb0] sm:$0xff]
        %v704 = vld [vmem:[%s233 + $0xb8] sm:$0xff]
        %v705 = vld [vmem:[%s233 + $0xc0] sm:$0xff]
        %v706 = vld [vmem:[%s233 + $0xc8] sm:$0xff]
        %v707 = vld [vmem:[%s233 + $0xd0] sm:$0xff]
        %v708 = vld [vmem:[%s233 + $0xd8] sm:$0xff]
        %v709 = vld [vmem:[%s233 + $0xe0] sm:$0xff]
        %v710 = vld [vmem:[%s233 + $0xe8] sm:$0xff]
        %v711 = vld [vmem:[%s233 + $0xf0] sm:$0xff]
        %v712 = vld [vmem:[%s233 + $0xf8] sm:$0xff]
        %v713 = vadd.f32 %v649, %v681
        %v714 = vadd.f32 %v650, %v682
        %v715 = vadd.f32 %v651, %v683
        %v716 = vadd.f32 %v652, %v684
        %v717 = vadd.f32 %v653, %v685
        %v718 = vadd.f32 %v654, %v686
        %v719 = vadd.f32 %v655, %v687
        %v720 = vadd.f32 %v656, %v688
        %v721 = vadd.f32 %v657, %v689
        %v722 = vadd.f32 %v658, %v690
        %v723 = vadd.f32 %v659, %v691
        %v724 = vadd.f32 %v660, %v692
        %v725 = vadd.f32 %v661, %v693
        %v726 = vadd.f32 %v662, %v694
        %v727 = vadd.f32 %v663, %v695
        %v728 = vadd.f32 %v664, %v696
        %v729 = vadd.f32 %v665, %v697
        %v730 = vadd.f32 %v666, %v698
        %v731 = vadd.f32 %v667, %v699
        %v732 = vadd.f32 %v668, %v700
        %v733 = vadd.f32 %v669, %v701
        %v734 = vadd.f32 %v670, %v702
        %v735 = vadd.f32 %v671, %v703
        %v736 = vadd.f32 %v672, %v704
        %v737 = vadd.f32 %v673, %v705
        %v738 = vadd.f32 %v674, %v706
        %v739 = vadd.f32 %v675, %v707
        %v740 = vadd.f32 %v676, %v708
        %v741 = vadd.f32 %v677, %v709
        %v742 = vadd.f32 %v678, %v710
        %v743 = vadd.f32 %v679, %v711
        %v744 = vadd.f32 %v680, %v712
        %745 = vst [vmem:[%s239] sm:$0xff] %v713
        %746 = vst [vmem:[%s239 + $0x8] sm:$0xff] %v714
        %747 = vst [vmem:[%s239 + $0x10] sm:$0xff] %v715
        %748 = vst [vmem:[%s239 + $0x18] sm:$0xff] %v716
        %749 = vst [vmem:[%s239 + $0x20] sm:$0xff] %v717
        %750 = vst [vmem:[%s239 + $0x28] sm:$0xff] %v718
        %751 = vst [vmem:[%s239 + $0x30] sm:$0xff] %v719
        %752 = vst [vmem:[%s239 + $0x38] sm:$0xff] %v720
        %753 = vst [vmem:[%s239 + $0x40] sm:$0xff] %v721
        %754 = vst [vmem:[%s239 + $0x48] sm:$0xff] %v722
        %755 = vst [vmem:[%s239 + $0x50] sm:$0xff] %v723
        %756 = vst [vmem:[%s239 + $0x58] sm:$0xff] %v724
        %757 = vst [vmem:[%s239 + $0x60] sm:$0xff] %v725
        %758 = vst [vmem:[%s239 + $0x68] sm:$0xff] %v726
        %759 = vst [vmem:[%s239 + $0x70] sm:$0xff] %v727
        %760 = vst [vmem:[%s239 + $0x78] sm:$0xff] %v728
        %761 = vst [vmem:[%s239 + $0x80] sm:$0xff] %v729
        %762 = vst [vmem:[%s239 + $0x88] sm:$0xff] %v730
        %763 = vst [vmem:[%s239 + $0x90] sm:$0xff] %v731
        %764 = vst [vmem:[%s239 + $0x98] sm:$0xff] %v732
        %765 = vst [vmem:[%s239 + $0xa0] sm:$0xff] %v733
        %766 = vst [vmem:[%s239 + $0xa8] sm:$0xff] %v734
        %767 = vst [vmem:[%s239 + $0xb0] sm:$0xff] %v735
        %768 = vst [vmem:[%s239 + $0xb8] sm:$0xff] %v736
        %769 = vst [vmem:[%s239 + $0xc0] sm:$0xff] %v737
        %770 = vst [vmem:[%s239 + $0xc8] sm:$0xff] %v738
        %771 = vst [vmem:[%s239 + $0xd0] sm:$0xff] %v739
        %772 = vst [vmem:[%s239 + $0xd8] sm:$0xff] %v740
        %773 = vst [vmem:[%s239 + $0xe0] sm:$0xff] %v741
        %774 = vst [vmem:[%s239 + $0xe8] sm:$0xff] %v742
        %775 = vst [vmem:[%s239 + $0xf0] sm:$0xff] %v743
        %776 = vst [vmem:[%s239 + $0xf8] sm:$0xff] %v744
      $region40: #{conv2d_observer_forward.2} parent=31 // pred_fallthru
        _
      %s777 = smul.u32 32, %s18
      %p778 = scmp.lt.s32.totalorder %s777, 63
      %s779 = scalar_select %p778, %s777, 63
      %s780 = smul.addr %s779, 8
      %s781 = scalar_lea.vmem %s3, %s780
      // Predicated region
      $region41: #{conv2d_observer_forward.2} parent=31 // pred_check
        %p782 = pneg %p124
      $region42: #{conv2d_observer_forward.2} parent=31 // pred_check_branch
        %784 = sbr.rel (%p782) target = $region44
      $region43: #{conv2d_observer_forward.2} parent=31 // pred_region
        %s785 = smul.u32 32, %s18
      $region44: #{conv2d_observer_forward.2} parent=31 // pred_fallthru
        _
    $region32: #{conv2d_observer_forward.2} parent=5 // pred_fallthru
      _
    %p786 = scmp.le.s32.totalorder 2, %s9
    // Predicated region
    $region45: #{conv2d_observer_forward.2} parent=5 // pred_check
      %p787 = pneg %p786
    $region46: #{conv2d_observer_forward.2} parent=5 // pred_check_branch
      %789 = sbr.rel (%p787) target = $region48
    $region47: #{conv2d_observer_forward.2} parent=5 // pred_region
      %s790 = ssub.s32 %s9, 2
      // Predicated region
      $region49: #{conv2d_observer_forward.2} parent=47 // pred_check
        %p791 = pneg %p130
      $region50: #{conv2d_observer_forward.2} parent=47 // pred_check_branch
        %793 = sbr.rel (%p791) target = $region52
      $region51: #{conv2d_observer_forward.2} parent=47 // pred_region
        %s794 = smul.u32 32, %s20
        %p795 = scmp.lt.s32.totalorder %s794, 63
        %s796 = scalar_select %p795, %s794, 63
        %s797 = smul.addr %s796, 8
        %s798 = scalar_lea.vmem %s3, %s797
      $region52: #{conv2d_observer_forward.2} parent=47 // pred_fallthru
        _
    $region48: #{conv2d_observer_forward.2} parent=5 // pred_fallthru
      _
  $region6: #{conv2d_observer_forward.2} parent=0 // loop_footer
    %s13 = sadd.s32 1, %s9
  $region7: #{conv2d_observer_forward.2} parent=0 // loop_footer_branch
    %8 = sbr.rel target = $region3
  $region8: #{conv2d_observer_forward.2} parent=0 // loop_exit
    _

</llo_original>
